<compile_context>
chip_gen: v7x
topology: tpu7x:2x2x1
jax: 0.10.0
libtpu: 0.0.40
codegen_flags: <defaults>
</compile_context>

<pallas_src>
import functools
import math

import jax
import jax.numpy as jnp
from jax.experimental import pallas as pl
from jax.experimental.pallas import tpu as pltpu


# --------------------------------------------------------------------------- #
# Per-chip budgeting / tiling helpers
# --------------------------------------------------------------------------- #
def _chip_budget():
    """Return (max_block_bytes, vmem_limit_bytes) sized from physical VMEM.

    v5e/v6e: 128 MiB physical -> 8 MiB blocks, 64 MiB scoped limit.
    v7x    :  64 MiB physical -> 8 MiB blocks, 44 MiB scoped limit.
    """
    phys = 128 << 20
    try:
        info = pltpu.get_tpu_info()
        phys = int(getattr(info, "vmem_capacity_bytes", phys))
    except Exception:
        phys = 64 << 20  # conservative fallback if the query is unavailable
    if phys >= (128 << 20):
        return (8 << 20), (64 << 20)
    if phys >= (64 << 20):
        return (8 << 20), (44 << 20)
    return (2 << 20), max(8 << 20, phys // 2)


def _sublane_multiple(dtype):
    bits = jnp.dtype(dtype).itemsize * 8
    if bits >= 32:
        return 8
    if bits == 16:
        return 16
    return 32


def _round_up(n, m):
    return ((n + m - 1) // m) * m


def _pick_tile(n, *, unit_bytes, multiple, cap):
    """Tile size along one axis.

    Multiple of `multiple` (hardware tile), as large as fits `cap` bytes
    (unit_bytes = padded bytes per unit along this axis), never exceeding the
    axis extent (unless the full extent itself is below `multiple`, which is a
    legal full-dim block). Prefers a tile that divides n when it costs < 2x
    grid steps; otherwise a ragged (cdiv) grid is used by the caller.
    """
    if n <= multiple:
        return n
    t = max(multiple, (cap // max(unit_bytes, 1)) // multiple * multiple)
    t = min(t, (n // multiple) * multiple)
    k = t
    while 2 * k >= t and k >= multiple:
        if n % k == 0:
            return k
        k -= multiple
    return t


# --------------------------------------------------------------------------- #
# Kernels
# --------------------------------------------------------------------------- #
def _ln_cl_folded_kernel(x_ref, g_ref, b_ref, pool_ref, o_ref, *, c, eps):
    # x_ref: (TM, r*C) lane-dense; each 128-lane row holds r logical rows of C.
    # pool_ref: (r*C, r*C) block-diagonal ones -> group sums via the (idle) MXU.
    # g_ref/b_ref: (1, r*C) weight/bias tiled r times along lanes.
    x = x_ref[...].astype(jnp.float32)
    pool = pool_ref[...]
    inv_c = jnp.float32(1.0 / c)
    mean = jnp.dot(x, pool, preferred_element_type=jnp.float32) * inv_c
    xc = x - mean
    var = jnp.dot(xc * xc, pool, preferred_element_type=jnp.float32) * inv_c
    inv = jax.lax.rsqrt(var + eps)                               # EUP rsqrt
    y = xc * inv
    y = y * g_ref[...].astype(jnp.float32) + b_ref[...].astype(jnp.float32)
    o_ref[...] = y.astype(o_ref.dtype)


def _ln_cl_kernel(x_ref, g_ref, b_ref, o_ref, *, eps):
    # x_ref: (TM, C) -- normalize over the last (lane) axis.  Used when C is
    # already a multiple of 128 lanes (or folding is not possible).
    x = x_ref[...].astype(jnp.float32)
    u = jnp.mean(x, axis=-1, keepdims=True)
    xc = x - u
    s = jnp.mean(xc * xc, axis=-1, keepdims=True)                # biased variance
    inv = jax.lax.rsqrt(s + eps)
    y = xc * inv
    y = y * g_ref[...].astype(jnp.float32) + b_ref[...].astype(jnp.float32)
    o_ref[...] = y.astype(o_ref.dtype)


def _ln_cf_kernel(x_ref, g_ref, b_ref, o_ref, *, eps):
    # x_ref: (1, C, TS) -- spatial on the 128-lane axis (lane-dense loads/stores),
    #                      channel reduction over sublanes (XLU).
    # g_ref/b_ref: (C, 1)
    x = x_ref[0].astype(jnp.float32)                             # (C, TS)
    u = jnp.mean(x, axis=0, keepdims=True)                       # (1, TS)
    xc = x - u
    s = jnp.mean(xc * xc, axis=0, keepdims=True)                 # biased variance
    inv = jax.lax.rsqrt(s + eps)
    y = xc * inv
    y = y * g_ref[...].astype(jnp.float32) + b_ref[...].astype(jnp.float32)
    o_ref[0] = y.astype(o_ref.dtype)


# --------------------------------------------------------------------------- #
# Wrapper
# --------------------------------------------------------------------------- #
def layer_norm_forward(x, weight, bias, eps=1e-6, data_format="channels_last"):
    """Pallas LayerNorm matching the PyTorch module's forward."""
    if data_format not in ("channels_last", "channels_first"):
        raise NotImplementedError(data_format)

    eps = float(eps)
    itemsize = jnp.dtype(x.dtype).itemsize
    sub = _sublane_multiple(x.dtype)
    block_cap, vmem_limit = _chip_budget()

    if data_format == "channels_last":
        C = x.shape[-1]
        M = math.prod(x.shape[:-1])

        r = (128 // C) if (0 < C < 128 and 128 % C == 0) else 1
        if r > 1 and M % r == 0:
            # ---- lane-dense folded path (the big lever for small C) ---- #
            rC = r * C
            Mf = M // r
            x2 = x.reshape(Mf, rC)                       # free: same memory layout
            g2 = jnp.tile(weight.reshape(-1), r).reshape(1, rC)
            b2 = jnp.tile(bias.reshape(-1), r).reshape(1, rC)
            idx = jnp.arange(rC)
            pool = (idx[:, None] // C == idx[None, :] // C).astype(jnp.float32)

            TM = _pick_tile(Mf, unit_bytes=_round_up(rC, 128) * itemsize,
                            multiple=sub, cap=block_cap)
            grid = (pl.cdiv(Mf, TM),)

            kernel = functools.partial(_ln_cl_folded_kernel, c=C, eps=eps)
            out = pl.pallas_call(
                kernel,
                out_shape=jax.ShapeDtypeStruct((Mf, rC), x.dtype),
                grid_spec=pltpu.PrefetchScalarGridSpec(
                    num_scalar_prefetch=0,
                    grid=grid,
                    in_specs=[
                        pl.BlockSpec((TM, rC), lambda i: (i, 0)),
                        pl.BlockSpec((1, rC), lambda i: (0, 0)),    # grid-invariant
                        pl.BlockSpec((1, rC), lambda i: (0, 0)),    # grid-invariant
                        pl.BlockSpec((rC, rC), lambda i: (0, 0)),   # grid-invariant
                    ],
                    out_specs=pl.BlockSpec((TM, rC), lambda i: (i, 0)),
                ),
                compiler_params=pltpu.CompilerParams(
                    dimension_semantics=("parallel",),
                    vmem_limit_bytes=vmem_limit),
                cost_estimate=pl.CostEstimate(
                    flops=int(8 * M * C + 4 * Mf * rC * rC),
                    transcendentals=int(M),
                    bytes_accessed=int(2 * M * C * itemsize + 3 * rC * rC * 4)),
            )(x2, g2, b2, pool)
            return out.reshape(x.shape)

        # ---- generic channels_last path (C multiple of 128, or fold n/a) ---- #
        x2 = x.reshape(M, C)
        g2 = weight.reshape(1, C)
        b2 = bias.reshape(1, C)
        TM = _pick_tile(M, unit_bytes=_round_up(C, 128) * itemsize,
                        multiple=sub, cap=block_cap)
        grid = (pl.cdiv(M, TM),)

        kernel = functools.partial(_ln_cl_kernel, eps=eps)
        out = pl.pallas_call(
            kernel,
            out_shape=jax.ShapeDtypeStruct((M, C), x.dtype),
            grid_spec=pltpu.PrefetchScalarGridSpec(
                num_scalar_prefetch=0,
                grid=grid,
                in_specs=[
                    pl.BlockSpec((TM, C), lambda i: (i, 0)),
                    pl.BlockSpec((1, C), lambda i: (0, 0)),         # grid-invariant
                    pl.BlockSpec((1, C), lambda i: (0, 0)),         # grid-invariant
                ],
                out_specs=pl.BlockSpec((TM, C), lambda i: (i, 0)),
            ),
            compiler_params=pltpu.CompilerParams(
                dimension_semantics=("parallel",),
                vmem_limit_bytes=vmem_limit),
            cost_estimate=pl.CostEstimate(
                flops=int(8 * M * C),
                transcendentals=int(M),
                bytes_accessed=int(2 * M * C * itemsize + 2 * C * 4)),
        )(x2, g2, b2)
        return out.reshape(x.shape)

    # ----- channels_first: x is (B, C, *spatial), normalize over dim=1 ----- #
    B, C = x.shape[0], x.shape[1]
    S = math.prod(x.shape[2:]) if x.ndim > 2 else 1
    x3 = x.reshape(B, C, S)
    g2 = weight.reshape(C, 1)
    b2 = bias.reshape(C, 1)

    TS = _pick_tile(S, unit_bytes=_round_up(C, sub) * itemsize,
                    multiple=128, cap=block_cap)
    n_s = pl.cdiv(S, TS)
    grid = (B * n_s,)   # flattened 1-D grid: keeps both v7x TCs busy at small B

    kernel = functools.partial(_ln_cf_kernel, eps=eps)
    out = pl.pallas_call(
        kernel,
        out_shape=jax.ShapeDtypeStruct((B, C, S), x.dtype),
        grid_spec=pltpu.PrefetchScalarGridSpec(
            num_scalar_prefetch=0,
            grid=grid,
            in_specs=[
                pl.BlockSpec((1, C, TS), lambda i: (i // n_s, 0, i % n_s)),
                pl.BlockSpec((C, 1), lambda i: (0, 0)),              # grid-invariant
                pl.BlockSpec((C, 1), lambda i: (0, 0)),              # grid-invariant
            ],
            out_specs=pl.BlockSpec((1, C, TS), lambda i: (i // n_s, 0, i % n_s)),
        ),
        compiler_params=pltpu.CompilerParams(
            dimension_semantics=("parallel",),
            vmem_limit_bytes=vmem_limit),
        cost_estimate=pl.CostEstimate(
            flops=int(8 * B * C * S),
            transcendentals=int(B * S),
            bytes_accessed=int(2 * B * C * S * itemsize + 2 * C * 4)),
    )(x3, g2, b2)
    return out.reshape(x.shape)


# --------------------------------------------------------------------------- #
# Plain-JAX reference (mirrors the PyTorch forward)
# --------------------------------------------------------------------------- #
def _reference(x, weight, bias, eps, data_format):
    if data_format == "channels_last":
        u = jnp.mean(x, axis=-1, keepdims=True)
        s = jnp.mean((x - u) ** 2, axis=-1, keepdims=True)
        y = (x - u) / jnp.sqrt(s + eps)
        return y * weight + bias
    u = jnp.mean(x, axis=1, keepdims=True)
    s = jnp.mean((x - u) ** 2, axis=1, keepdims=True)
    y = (x - u) / jnp.sqrt(s + eps)
    shape = (1, -1) + (1,) * (x.ndim - 2)
    return weight.reshape(shape) * y + bias.reshape(shape)


# --------------------------------------------------------------------------- #
if __name__ == "__main__":
    key = jax.random.PRNGKey(0)
    k1, k2, k3, k4, k5, k6 = jax.random.split(key, 6)
    eps = 1e-6

    # ---- channels_last: (batch=2, h=16, w=16, hidden=32) ---- #
    C_last = 32
    x_cl = jax.random.normal(k1, (2, 16, 16, C_last), jnp.float32)
    w_cl = 1.0 + 0.1 * jax.random.normal(k2, (C_last,), jnp.float32)
    b_cl = 0.1 * jax.random.normal(k3, (C_last,), jnp.float32)

    out_cl = layer_norm_forward(x_cl, w_cl, b_cl, eps, "channels_last")
    out_cl = jax.block_until_ready(out_cl)
    ref_cl = jax.block_until_ready(_reference(x_cl, w_cl, b_cl, eps, "channels_last"))
    assert out_cl.shape == x_cl.shape
    assert jnp.allclose(out_cl, ref_cl, rtol=1e-4, atol=1e-5), \
        "channels_last mismatch vs reference"

    # ---- channels_first: (batch=2, channels=4, spatial=16x16) ---- #
    C_first = 4
    x_cf = jax.random.normal(k4, (2, C_first, 16, 16), jnp.float32)
    w_cf = 1.0 + 0.1 * jax.random.normal(k5, (C_first,), jnp.float32)
    b_cf = 0.1 * jax.random.normal(k6, (C_first,), jnp.float32)

    out_cf = layer_norm_forward(x_cf, w_cf, b_cf, eps, "channels_first")
    out_cf = jax.block_until_ready(out_cf)
    ref_cf = jax.block_until_ready(_reference(x_cf, w_cf, b_cf, eps, "channels_first"))
    assert out_cf.shape == x_cf.shape
    assert jnp.allclose(out_cf, ref_cf, rtol=1e-4, atol=1e-5), \
        "channels_first mismatch vs reference"

    print("KERNEL_OK")
</pallas_src>

<mosaic_0001>
module attributes {stable_mosaic.version = 11 : i64} {
  func.func @_ln_cl_folded_kernel(%arg0: i32, %arg1: memref<128x128xf32, #tpu.memory_space<vmem>>, %arg2: memref<1x128xf32, #tpu.memory_space<vmem>>, %arg3: memref<1x128xf32, #tpu.memory_space<vmem>>, %arg4: memref<128x128xf32, #tpu.memory_space<vmem>>, %arg5: memref<128x128xf32, #tpu.memory_space<vmem>>) attributes {dimension_semantics = [#tpu.dimension_semantics<parallel>], iteration_bounds = array<i64: 1>, scalar_prefetch = 0 : i64, scratch_operands = 0 : i64, tpu.core_type = #tpu.core_type<tc>, window_params = [{transform_indices = @transform_0, window_bounds = array<i64: 128, 128>}, {pipeline_mode = #tpu.pipeline_mode<synchronous>, transform_indices = @transform_1, window_bounds = array<i64: 1, 128>}, {pipeline_mode = #tpu.pipeline_mode<synchronous>, transform_indices = @transform_2, window_bounds = array<i64: 1, 128>}, {pipeline_mode = #tpu.pipeline_mode<synchronous>, transform_indices = @transform_3, window_bounds = array<i64: 128, 128>}, {transform_indices = @transform_4, window_bounds = array<i64: 128, 128>}]} {
    %c0 = arith.constant 0 : index
    %c0_0 = arith.constant 0 : index
    %0 = vector.load %arg1[%c0, %c0_0] : memref<128x128xf32, #tpu.memory_space<vmem>>, vector<128x128xf32>
    %c0_1 = arith.constant 0 : index
    %c0_2 = arith.constant 0 : index
    %1 = vector.load %arg4[%c0_1, %c0_2] : memref<128x128xf32, #tpu.memory_space<vmem>>, vector<128x128xf32>
    %cst = arith.constant dense<0.000000e+00> : vector<128x128xf32>
    %2 = tpu.matmul %0, %1, %cst {dimension_numbers = #tpu.dot_dimension_numbers<[1], [0], [0], [1], [0, 0, 1, 1], [], []>} : vector<128x128xf32>, vector<128x128xf32>, vector<128x128xf32> -> vector<128x128xf32>
    %cst_3 = arith.constant 3.125000e-02 : f32
    %3 = vector.broadcast %cst_3 : f32 to vector<128x128xf32>
    %4 = arith.mulf %2, %3 : vector<128x128xf32>
    %5 = arith.subf %0, %4 : vector<128x128xf32>
    %6 = arith.mulf %5, %5 : vector<128x128xf32>
    %cst_4 = arith.constant dense<0.000000e+00> : vector<128x128xf32>
    %7 = tpu.matmul %6, %1, %cst_4 {dimension_numbers = #tpu.dot_dimension_numbers<[1], [0], [0], [1], [0, 0, 1, 1], [], []>} : vector<128x128xf32>, vector<128x128xf32>, vector<128x128xf32> -> vector<128x128xf32>
    %cst_5 = arith.constant 3.125000e-02 : f32
    %8 = vector.broadcast %cst_5 : f32 to vector<128x128xf32>
    %9 = arith.mulf %7, %8 : vector<128x128xf32>
    %cst_6 = arith.constant 9.99999997E-7 : f32
    %10 = vector.broadcast %cst_6 : f32 to vector<128x128xf32>
    %11 = arith.addf %9, %10 : vector<128x128xf32>
    %12 = math.rsqrt %11 : vector<128x128xf32>
    %13 = arith.mulf %5, %12 : vector<128x128xf32>
    %c0_7 = arith.constant 0 : index
    %c0_8 = arith.constant 0 : index
    %14 = vector.load %arg2[%c0_7, %c0_8] : memref<1x128xf32, #tpu.memory_space<vmem>>, vector<1x128xf32>
    %15 = vector.broadcast %14 : vector<1x128xf32> to vector<128x128xf32>
    %16 = arith.mulf %13, %15 : vector<128x128xf32>
    %c0_9 = arith.constant 0 : index
    %c0_10 = arith.constant 0 : index
    %17 = vector.load %arg3[%c0_9, %c0_10] : memref<1x128xf32, #tpu.memory_space<vmem>>, vector<1x128xf32>
    %18 = vector.broadcast %17 : vector<1x128xf32> to vector<128x128xf32>
    %19 = arith.addf %16, %18 : vector<128x128xf32>
    %c0_11 = arith.constant 0 : index
    %c0_12 = arith.constant 0 : index
    %20 = vector.load %arg5[%c0_11, %c0_12] : memref<128x128xf32, #tpu.memory_space<vmem>>, vector<128x128xf32>
    tpu.vector_store %arg5[%c0_11, %c0_12], %19 {strides = array<i32>} : memref<128x128xf32, #tpu.memory_space<vmem>>, vector<128x128xf32>,
    return
  }
  func.func @transform_0(%arg0: i32) -> (i32, i32) {
    %c0_i32 = arith.constant 0 : i32
    %c0_i32_0 = arith.constant 0 : i32
    return %arg0, %c0_i32 : i32, i32
  }
  func.func @transform_1(%arg0: i32) -> (i32, i32) {
    %c0_i32 = arith.constant 0 : i32
    %c0_i32_0 = arith.constant 0 : i32
    %c0_i32_1 = arith.constant 0 : i32
    return %c0_i32, %c0_i32_0 : i32, i32
  }
  func.func @transform_2(%arg0: i32) -> (i32, i32) {
    %c0_i32 = arith.constant 0 : i32
    %c0_i32_0 = arith.constant 0 : i32
    %c0_i32_1 = arith.constant 0 : i32
    return %c0_i32, %c0_i32_0 : i32, i32
  }
  func.func @transform_3(%arg0: i32) -> (i32, i32) {
    %c0_i32 = arith.constant 0 : i32
    %c0_i32_0 = arith.constant 0 : i32
    %c0_i32_1 = arith.constant 0 : i32
    return %c0_i32, %c0_i32_0 : i32, i32
  }
  func.func @transform_4(%arg0: i32) -> (i32, i32) {
    %c0_i32 = arith.constant 0 : i32
    %c0_i32_0 = arith.constant 0 : i32
    return %arg0, %c0_i32 : i32, i32
  }
}

</mosaic_0001>

<llo_original>
// kernel: tpu_custom_call.1
$region0: #{tpu_custom_call.1}
  #allocation0 [shape = 'u32[]', space=smem, size = 0x4, offset = 0x4, fixed_abs, tag = 'smem constant byte address 0x4 - core index']
  #allocation1 [shape = 'u32[144,128]{1,0:T(1,128)}', space=vmem, size = 0x12000, scoped, tag = 'internal scratch']
  %s0 = inlined_call_operand.hbm [shape: f32[128,128], index: 0, kind: input, shape index: {}]
  %s1 = inlined_call_operand.vmem [shape: f32[1,128], index: 1, kind: input, shape index: {}]
  %s2 = inlined_call_operand.vmem [shape: f32[1,128], index: 2, kind: input, shape index: {}]
  %s3 = inlined_call_operand.hbm [shape: f32[128,128], index: 3, kind: input, shape index: {}]
  %s4 = inlined_call_operand.hbm [shape: f32[128,128], index: 4, kind: output, shape index: {}]
  %s5 = sld [smem:[#allocation0]]
  $region34: #{tpu_custom_call.1} parent=0
    _
  %s7 = ssub.s32 1, %s5
  %s8 = scalar_select 0, %s7, %s5
  $region1: #{tpu_custom_call.1} parent=0
    #allocation2 [shape = 'u8[65536]{0}', space=vmem, size = 0x10000, scoped, tag = 'input window, operand 0, single buffered']
    #allocation3 [shape = 's32[1]{0}', space=sflag, size = 0x4, scoped, tag = 'scoped memory for tpu_custom_call.1']
    #allocation4 [shape = 's32[1]{0}', space=sflag, size = 0x4, scoped, tag = 'scoped memory for tpu_custom_call.1']
    #allocation5 [shape = 'u8[65536]{0}', space=vmem, size = 0x10000, scoped, tag = 'input window, operand 3, single buffered']
    #allocation6 [shape = 's32[1]{0}', space=sflag, size = 0x4, scoped, tag = 'scoped memory for tpu_custom_call.1']
    #allocation7 [shape = 'u8[65536]{0}', space=vmem, size = 0x10000, scoped, tag = 'output window, operand 0, single buffered']
    %9 = vsyncpa [#allocation3], 0
    %10 = vsyncpa [#allocation6], 0
    %11 = vsyncpa [#allocation4], 0
    // Predicated region
    $region2: #{tpu_custom_call.1} parent=1 // pred_check
      _
    $region3: #{tpu_custom_call.1} parent=1 // pred_check_branch
      %13 = sbr.rel (0) target = $region5
    $region4: #{tpu_custom_call.1} parent=1 // pred_region
      %s15 = ssub.s32 2048, 2048
      %16 = vsyncadd [#allocation3], %s15
      %s17 = sshll.u32 [#allocation2], 4
      %s18 = int_to_ptr.vmem [resolvable:$true] %s17
      %23 = dma.hbm_to_vmem [thread:$0]  %s0, 2048, %s18, [#allocation3], 128, 128, 8
    $region5: #{tpu_custom_call.1} parent=1 // pred_fallthru
      _
    // Predicated region
    $region6: #{tpu_custom_call.1} parent=1 // pred_check
      _
    $region7: #{tpu_custom_call.1} parent=1 // pred_check_branch
      %25 = sbr.rel (0) target = $region9
    $region8: #{tpu_custom_call.1} parent=1 // pred_region
      _
    $region9: #{tpu_custom_call.1} parent=1 // pred_fallthru
      _
    // Predicated region
    $region10: #{tpu_custom_call.1} parent=1 // pred_check
      _
    $region11: #{tpu_custom_call.1} parent=1 // pred_check_branch
      %27 = sbr.rel (0) target = $region13
    $region12: #{tpu_custom_call.1} parent=1 // pred_region
      _
    $region13: #{tpu_custom_call.1} parent=1 // pred_fallthru
      _
    // Predicated region
    $region14: #{tpu_custom_call.1} parent=1 // pred_check
      _
    $region15: #{tpu_custom_call.1} parent=1 // pred_check_branch
      %29 = sbr.rel (0) target = $region17
    $region16: #{tpu_custom_call.1} parent=1 // pred_region
      %s31 = ssub.s32 2048, 2048
      %32 = vsyncadd [#allocation6], %s31
      %s33 = sshll.u32 [#allocation5], 4
      %s34 = int_to_ptr.vmem [resolvable:$true] %s33
      %39 = dma.hbm_to_vmem [thread:$0]  %s3, 2048, %s34, [#allocation6], 128, 128, 8
    $region17: #{tpu_custom_call.1} parent=1 // pred_fallthru
      _
    // Predicated region
    $region18: #{tpu_custom_call.1} parent=1 // pred_check
      _
    $region19: #{tpu_custom_call.1} parent=1 // pred_check_branch
      %41 = sbr.rel (0) target = $region21
    $region20: #{tpu_custom_call.1} parent=1 // pred_region
      %42 = dma.done [#allocation3], 2048
    $region21: #{tpu_custom_call.1} parent=1 // pred_fallthru
      _
    // Predicated region
    $region22: #{tpu_custom_call.1} parent=1 // pred_check
      _
    $region23: #{tpu_custom_call.1} parent=1 // pred_check_branch
      %44 = sbr.rel (0) target = $region25
    $region24: #{tpu_custom_call.1} parent=1 // pred_region
      %45 = dma.done [#allocation6], 2048
    $region25: #{tpu_custom_call.1} parent=1 // pred_fallthru
      _
    %v46 = vld [vmem:[#allocation2] sm:$0xff]
    %v47 = vld [vmem:[#allocation2 + $0x8] sm:$0xff]
    %v48 = vld [vmem:[#allocation2 + $0x10] sm:$0xff]
    %v49 = vld [vmem:[#allocation2 + $0x18] sm:$0xff]
    %v50 = vld [vmem:[#allocation2 + $0x20] sm:$0xff]
    %v51 = vld [vmem:[#allocation2 + $0x28] sm:$0xff]
    %v52 = vld [vmem:[#allocation2 + $0x30] sm:$0xff]
    %v53 = vld [vmem:[#allocation2 + $0x38] sm:$0xff]
    %v54 = vld [vmem:[#allocation2 + $0x40] sm:$0xff]
    %v55 = vld [vmem:[#allocation2 + $0x48] sm:$0xff]
    %v56 = vld [vmem:[#allocation2 + $0x50] sm:$0xff]
    %v57 = vld [vmem:[#allocation2 + $0x58] sm:$0xff]
    %v58 = vld [vmem:[#allocation2 + $0x60] sm:$0xff]
    %v59 = vld [vmem:[#allocation2 + $0x68] sm:$0xff]
    %v60 = vld [vmem:[#allocation2 + $0x70] sm:$0xff]
    %v61 = vld [vmem:[#allocation2 + $0x78] sm:$0xff]
    %v62 = vld [vmem:[#allocation5] sm:$0xff]
    %v63 = vld [vmem:[#allocation5 + $0x8] sm:$0xff]
    %v64 = vld [vmem:[#allocation5 + $0x10] sm:$0xff]
    %v65 = vld [vmem:[#allocation5 + $0x18] sm:$0xff]
    %v66 = vld [vmem:[#allocation5 + $0x20] sm:$0xff]
    %v67 = vld [vmem:[#allocation5 + $0x28] sm:$0xff]
    %v68 = vld [vmem:[#allocation5 + $0x30] sm:$0xff]
    %v69 = vld [vmem:[#allocation5 + $0x38] sm:$0xff]
    %v70 = vld [vmem:[#allocation5 + $0x40] sm:$0xff]
    %v71 = vld [vmem:[#allocation5 + $0x48] sm:$0xff]
    %v72 = vld [vmem:[#allocation5 + $0x50] sm:$0xff]
    %v73 = vld [vmem:[#allocation5 + $0x58] sm:$0xff]
    %v74 = vld [vmem:[#allocation5 + $0x60] sm:$0xff]
    %v75 = vld [vmem:[#allocation5 + $0x68] sm:$0xff]
    %v76 = vld [vmem:[#allocation5 + $0x70] sm:$0xff]
    %v77 = vld [vmem:[#allocation5 + $0x78] sm:$0xff]
    %78 = vmatprep.subr.mxu0 0.0
    %79 = vmatpush1.msra.mxu0 %v62
    %80 = vmatprep.subr.mxu0 0.0
    %81 = vmatpush1.msra.mxu0 %v63
    %82 = vmatprep.subr.mxu0 0.0
    %83 = vmatpush1.msra.mxu0 %v64
    %84 = vmatprep.subr.mxu0 0.0
    %85 = vmatpush1.msra.mxu0 %v65
    %86 = vmatprep.subr.mxu0 0.0
    %87 = vmatpush1.msra.mxu0 %v66
    %88 = vmatprep.subr.mxu0 0.0
    %89 = vmatpush1.msra.mxu0 %v67
    %90 = vmatprep.subr.mxu0 0.0
    %91 = vmatpush1.msra.mxu0 %v68
    %92 = vmatprep.subr.mxu0 0.0
    %93 = vmatpush1.msra.mxu0 %v69
    %94 = vmatprep.subr.mxu0 0.0
    %95 = vmatpush1.msra.mxu0 %v70
    %96 = vmatprep.subr.mxu0 0.0
    %97 = vmatpush1.msra.mxu0 %v71
    %98 = vmatprep.subr.mxu0 0.0
    %99 = vmatpush1.msra.mxu0 %v72
    %100 = vmatprep.subr.mxu0 0.0
    %101 = vmatpush1.msra.mxu0 %v73
    %102 = vmatprep.subr.mxu0 0.0
    %103 = vmatpush1.msra.mxu0 %v74
    %104 = vmatprep.subr.mxu0 0.0
    %105 = vmatpush1.msra.mxu0 %v75
    %106 = vmatprep.subr.mxu0 0.0
    %107 = vmatpush1.msra.mxu0 %v76
    %108 = vmatprep.subr.mxu0 0.0
    %109 = vmatpush1.msra.mxu0 %v77
    %110 = vmatprep.subr.mxu0 0.0
    %111 = vmatpush1.msra.mxu0 0.0
    %112 = vmatprep.subr.mxu0 0.0
    %113 = vmatpush1.msra.mxu0 0.0
    %114 = vmatprep.subr.mxu0 0.0
    %115 = vmatpush1.msra.mxu0 0.0
    %116 = vmatprep.subr.mxu0 0.0
    %117 = vmatpush1.msra.mxu0 0.0
    %118 = vmatprep.subr.mxu0 0.0
    %119 = vmatpush1.msra.mxu0 0.0
    %120 = vmatprep.subr.mxu0 0.0
    %121 = vmatpush1.msra.mxu0 0.0
    %122 = vmatprep.subr.mxu0 0.0
    %123 = vmatpush1.msra.mxu0 0.0
    %124 = vmatprep.subr.mxu0 0.0
    %125 = vmatpush1.msra.mxu0 0.0
    %126 = vmatprep.subr.mxu0 0.0
    %127 = vmatpush1.msra.mxu0 0.0
    %128 = vmatprep.subr.mxu0 0.0
    %129 = vmatpush1.msra.mxu0 0.0
    %130 = vmatprep.subr.mxu0 0.0
    %131 = vmatpush1.msra.mxu0 0.0
    %132 = vmatprep.subr.mxu0 0.0
    %133 = vmatpush1.msra.mxu0 0.0
    %134 = vmatprep.subr.mxu0 0.0
    %135 = vmatpush1.msra.mxu0 0.0
    %136 = vmatprep.subr.mxu0 0.0
    %137 = vmatpush1.msra.mxu0 0.0
    %138 = vmatprep.subr.mxu0 0.0
    %139 = vmatpush1.msra.mxu0 0.0
    %140 = vmatprep.subr.mxu0 0.0
    %141 = vmatpush1.msra.mxu0 0.0
    %142 = vmatprep.mubr.f32.mxu0 0.0
    %143 = vmatmul.mubr.f32.gmra.mrb[0].mxu0 %v46
    %v144 = vpop.f32.mrb[0].mxu0
    %v145 = vadd.f32 0.0, %v144
    %v146 = vpop.f32.mrb[0].mxu0
    %147 = vmatprep.mubr.f32.mxu0 0.0
    %148 = vmatmul.mubr.f32.gmra.mrb[0].mxu0 %v47
    %v149 = vpop.f32.mrb[0].mxu0
    %v150 = vadd.f32 0.0, %v149
    %v151 = vpop.f32.mrb[0].mxu0
    %152 = vmatprep.mubr.f32.mxu0 0.0
    %153 = vmatmul.mubr.f32.gmra.mrb[0].mxu0 %v48
    %v154 = vpop.f32.mrb[0].mxu0
    %v155 = vadd.f32 0.0, %v154
    %v156 = vpop.f32.mrb[0].mxu0
    %157 = vmatprep.mubr.f32.mxu0 0.0
    %158 = vmatmul.mubr.f32.gmra.mrb[0].mxu0 %v49
    %v159 = vpop.f32.mrb[0].mxu0
    %v160 = vadd.f32 0.0, %v159
    %v161 = vpop.f32.mrb[0].mxu0
    %162 = vmatprep.mubr.f32.mxu0 0.0
    %163 = vmatmul.mubr.f32.gmra.mrb[0].mxu0 %v50
    %v164 = vpop.f32.mrb[0].mxu0
    %v165 = vadd.f32 0.0, %v164
    %v166 = vpop.f32.mrb[0].mxu0
    %167 = vmatprep.mubr.f32.mxu0 0.0
    %168 = vmatmul.mubr.f32.gmra.mrb[0].mxu0 %v51
    %v169 = vpop.f32.mrb[0].mxu0
    %v170 = vadd.f32 0.0, %v169
    %v171 = vpop.f32.mrb[0].mxu0
    %172 = vmatprep.mubr.f32.mxu0 0.0
    %173 = vmatmul.mubr.f32.gmra.mrb[0].mxu0 %v52
    %v174 = vpop.f32.mrb[0].mxu0
    %v175 = vadd.f32 0.0, %v174
    %v176 = vpop.f32.mrb[0].mxu0
    %177 = vmatprep.mubr.f32.mxu0 0.0
    %178 = vmatmul.mubr.f32.gmra.mrb[0].mxu0 %v53
    %v179 = vpop.f32.mrb[0].mxu0
    %v180 = vadd.f32 0.0, %v179
    %v181 = vpop.f32.mrb[0].mxu0
    %182 = vmatprep.mubr.f32.mxu0 0.0
    %183 = vmatmul.mubr.f32.gmra.mrb[0].mxu0 %v54
    %v184 = vpop.f32.mrb[0].mxu0
    %v185 = vadd.f32 0.0, %v184
    %v186 = vpop.f32.mrb[0].mxu0
    %187 = vmatprep.mubr.f32.mxu0 0.0
    %188 = vmatmul.mubr.f32.gmra.mrb[0].mxu0 %v55
    %v189 = vpop.f32.mrb[0].mxu0
    %v190 = vadd.f32 0.0, %v189
    %v191 = vpop.f32.mrb[0].mxu0
    %192 = vmatprep.mubr.f32.mxu0 0.0
    %193 = vmatmul.mubr.f32.gmra.mrb[0].mxu0 %v56
    %v194 = vpop.f32.mrb[0].mxu0
    %v195 = vadd.f32 0.0, %v194
    %v196 = vpop.f32.mrb[0].mxu0
    %197 = vmatprep.mubr.f32.mxu0 0.0
    %198 = vmatmul.mubr.f32.gmra.mrb[0].mxu0 %v57
    %v199 = vpop.f32.mrb[0].mxu0
    %v200 = vadd.f32 0.0, %v199
    %v201 = vpop.f32.mrb[0].mxu0
    %202 = vmatprep.mubr.f32.mxu0 0.0
    %203 = vmatmul.mubr.f32.gmra.mrb[0].mxu0 %v58
    %v204 = vpop.f32.mrb[0].mxu0
    %v205 = vadd.f32 0.0, %v204
    %v206 = vpop.f32.mrb[0].mxu0
    %207 = vmatprep.mubr.f32.mxu0 0.0
    %208 = vmatmul.mubr.f32.gmra.mrb[0].mxu0 %v59
    %v209 = vpop.f32.mrb[0].mxu0
    %v210 = vadd.f32 0.0, %v209
    %v211 = vpop.f32.mrb[0].mxu0
    %212 = vmatprep.mubr.f32.mxu0 0.0
    %213 = vmatmul.mubr.f32.gmra.mrb[0].mxu0 %v60
    %v214 = vpop.f32.mrb[0].mxu0
    %v215 = vadd.f32 0.0, %v214
    %v216 = vpop.f32.mrb[0].mxu0
    %217 = vmatprep.mubr.f32.mxu0 0.0
    %218 = vmatmul.mubr.f32.gmra.mrb[0].mxu0 %v61
    %v219 = vpop.f32.mrb[0].mxu0
    %v220 = vadd.f32 0.0, %v219
    %v221 = vpop.f32.mrb[0].mxu0
    %222 = vdwg.mxu0
    %v223 = vmul.f32 %v145, 0.03125
    %v224 = vmul.f32 %v150, 0.03125
    %v225 = vmul.f32 %v155, 0.03125
    %v226 = vmul.f32 %v160, 0.03125
    %v227 = vmul.f32 %v165, 0.03125
    %v228 = vmul.f32 %v170, 0.03125
    %v229 = vmul.f32 %v175, 0.03125
    %v230 = vmul.f32 %v180, 0.03125
    %v231 = vmul.f32 %v185, 0.03125
    %v232 = vmul.f32 %v190, 0.03125
    %v233 = vmul.f32 %v195, 0.03125
    %v234 = vmul.f32 %v200, 0.03125
    %v235 = vmul.f32 %v205, 0.03125
    %v236 = vmul.f32 %v210, 0.03125
    %v237 = vmul.f32 %v215, 0.03125
    %v238 = vmul.f32 %v220, 0.03125
    %v239 = vsub.f32 %v46, %v223
    %v240 = vsub.f32 %v47, %v224
    %v241 = vsub.f32 %v48, %v225
    %v242 = vsub.f32 %v49, %v226
    %v243 = vsub.f32 %v50, %v227
    %v244 = vsub.f32 %v51, %v228
    %v245 = vsub.f32 %v52, %v229
    %v246 = vsub.f32 %v53, %v230
    %v247 = vsub.f32 %v54, %v231
    %v248 = vsub.f32 %v55, %v232
    %v249 = vsub.f32 %v56, %v233
    %v250 = vsub.f32 %v57, %v234
    %v251 = vsub.f32 %v58, %v235
    %v252 = vsub.f32 %v59, %v236
    %v253 = vsub.f32 %v60, %v237
    %v254 = vsub.f32 %v61, %v238
    %v255 = vmul.f32 %v239, %v239
    %v256 = vmul.f32 %v240, %v240
    %v257 = vmul.f32 %v241, %v241
    %v258 = vmul.f32 %v242, %v242
    %v259 = vmul.f32 %v243, %v243
    %v260 = vmul.f32 %v244, %v244
    %v261 = vmul.f32 %v245, %v245
    %v262 = vmul.f32 %v246, %v246
    %v263 = vmul.f32 %v247, %v247
    %v264 = vmul.f32 %v248, %v248
    %v265 = vmul.f32 %v249, %v249
    %v266 = vmul.f32 %v250, %v250
    %v267 = vmul.f32 %v251, %v251
    %v268 = vmul.f32 %v252, %v252
    %v269 = vmul.f32 %v253, %v253
    %v270 = vmul.f32 %v254, %v254
    %271 = vmatprep.subr.mxu0 0.0
    %272 = vmatpush1.msra.mxu0 %v62
    %273 = vmatprep.subr.mxu0 0.0
    %274 = vmatpush1.msra.mxu0 %v63
    %275 = vmatprep.subr.mxu0 0.0
    %276 = vmatpush1.msra.mxu0 %v64
    %277 = vmatprep.subr.mxu0 0.0
    %278 = vmatpush1.msra.mxu0 %v65
    %279 = vmatprep.subr.mxu0 0.0
    %280 = vmatpush1.msra.mxu0 %v66
    %281 = vmatprep.subr.mxu0 0.0
    %282 = vmatpush1.msra.mxu0 %v67
    %283 = vmatprep.subr.mxu0 0.0
    %284 = vmatpush1.msra.mxu0 %v68
    %285 = vmatprep.subr.mxu0 0.0
    %286 = vmatpush1.msra.mxu0 %v69
    %287 = vmatprep.subr.mxu0 0.0
    %288 = vmatpush1.msra.mxu0 %v70
    %289 = vmatprep.subr.mxu0 0.0
    %290 = vmatpush1.msra.mxu0 %v71
    %291 = vmatprep.subr.mxu0 0.0
    %292 = vmatpush1.msra.mxu0 %v72
    %293 = vmatprep.subr.mxu0 0.0
    %294 = vmatpush1.msra.mxu0 %v73
    %295 = vmatprep.subr.mxu0 0.0
    %296 = vmatpush1.msra.mxu0 %v74
    %297 = vmatprep.subr.mxu0 0.0
    %298 = vmatpush1.msra.mxu0 %v75
    %299 = vmatprep.subr.mxu0 0.0
    %300 = vmatpush1.msra.mxu0 %v76
    %301 = vmatprep.subr.mxu0 0.0
    %302 = vmatpush1.msra.mxu0 %v77
    %303 = vmatprep.subr.mxu0 0.0
    %304 = vmatpush1.msra.mxu0 0.0
    %305 = vmatprep.subr.mxu0 0.0
    %306 = vmatpush1.msra.mxu0 0.0
    %307 = vmatprep.subr.mxu0 0.0
    %308 = vmatpush1.msra.mxu0 0.0
    %309 = vmatprep.subr.mxu0 0.0
    %310 = vmatpush1.msra.mxu0 0.0
    %311 = vmatprep.subr.mxu0 0.0
    %312 = vmatpush1.msra.mxu0 0.0
    %313 = vmatprep.subr.mxu0 0.0
    %314 = vmatpush1.msra.mxu0 0.0
    %315 = vmatprep.subr.mxu0 0.0
    %316 = vmatpush1.msra.mxu0 0.0
    %317 = vmatprep.subr.mxu0 0.0
    %318 = vmatpush1.msra.mxu0 0.0
    %319 = vmatprep.subr.mxu0 0.0
    %320 = vmatpush1.msra.mxu0 0.0
    %321 = vmatprep.subr.mxu0 0.0
    %322 = vmatpush1.msra.mxu0 0.0
    %323 = vmatprep.subr.mxu0 0.0
    %324 = vmatpush1.msra.mxu0 0.0
    %325 = vmatprep.subr.mxu0 0.0
    %326 = vmatpush1.msra.mxu0 0.0
    %327 = vmatprep.subr.mxu0 0.0
    %328 = vmatpush1.msra.mxu0 0.0
    %329 = vmatprep.subr.mxu0 0.0
    %330 = vmatpush1.msra.mxu0 0.0
    %331 = vmatprep.subr.mxu0 0.0
    %332 = vmatpush1.msra.mxu0 0.0
    %333 = vmatprep.subr.mxu0 0.0
    %334 = vmatpush1.msra.mxu0 0.0
    %335 = vmatprep.mubr.f32.mxu0 0.0
    %336 = vmatmul.mubr.f32.gmra.mrb[0].mxu0 %v255
    %v337 = vpop.f32.mrb[0].mxu0
    %v338 = vadd.f32 0.0, %v337
    %v339 = vpop.f32.mrb[0].mxu0
    %340 = vmatprep.mubr.f32.mxu0 0.0
    %341 = vmatmul.mubr.f32.gmra.mrb[0].mxu0 %v256
    %v342 = vpop.f32.mrb[0].mxu0
    %v343 = vadd.f32 0.0, %v342
    %v344 = vpop.f32.mrb[0].mxu0
    %345 = vmatprep.mubr.f32.mxu0 0.0
    %346 = vmatmul.mubr.f32.gmra.mrb[0].mxu0 %v257
    %v347 = vpop.f32.mrb[0].mxu0
    %v348 = vadd.f32 0.0, %v347
    %v349 = vpop.f32.mrb[0].mxu0
    %350 = vmatprep.mubr.f32.mxu0 0.0
    %351 = vmatmul.mubr.f32.gmra.mrb[0].mxu0 %v258
    %v352 = vpop.f32.mrb[0].mxu0
    %v353 = vadd.f32 0.0, %v352
    %v354 = vpop.f32.mrb[0].mxu0
    %355 = vmatprep.mubr.f32.mxu0 0.0
    %356 = vmatmul.mubr.f32.gmra.mrb[0].mxu0 %v259
    %v357 = vpop.f32.mrb[0].mxu0
    %v358 = vadd.f32 0.0, %v357
    %v359 = vpop.f32.mrb[0].mxu0
    %360 = vmatprep.mubr.f32.mxu0 0.0
    %361 = vmatmul.mubr.f32.gmra.mrb[0].mxu0 %v260
    %v362 = vpop.f32.mrb[0].mxu0
    %v363 = vadd.f32 0.0, %v362
    %v364 = vpop.f32.mrb[0].mxu0
    %365 = vmatprep.mubr.f32.mxu0 0.0
    %366 = vmatmul.mubr.f32.gmra.mrb[0].mxu0 %v261
    %v367 = vpop.f32.mrb[0].mxu0
    %v368 = vadd.f32 0.0, %v367
    %v369 = vpop.f32.mrb[0].mxu0
    %370 = vmatprep.mubr.f32.mxu0 0.0
    %371 = vmatmul.mubr.f32.gmra.mrb[0].mxu0 %v262
    %v372 = vpop.f32.mrb[0].mxu0
    %v373 = vadd.f32 0.0, %v372
    %v374 = vpop.f32.mrb[0].mxu0
    %375 = vmatprep.mubr.f32.mxu0 0.0
    %376 = vmatmul.mubr.f32.gmra.mrb[0].mxu0 %v263
    %v377 = vpop.f32.mrb[0].mxu0
    %v378 = vadd.f32 0.0, %v377
    %v379 = vpop.f32.mrb[0].mxu0
    %380 = vmatprep.mubr.f32.mxu0 0.0
    %381 = vmatmul.mubr.f32.gmra.mrb[0].mxu0 %v264
    %v382 = vpop.f32.mrb[0].mxu0
    %v383 = vadd.f32 0.0, %v382
    %v384 = vpop.f32.mrb[0].mxu0
    %385 = vmatprep.mubr.f32.mxu0 0.0
    %386 = vmatmul.mubr.f32.gmra.mrb[0].mxu0 %v265
    %v387 = vpop.f32.mrb[0].mxu0
    %v388 = vadd.f32 0.0, %v387
    %v389 = vpop.f32.mrb[0].mxu0
    %390 = vmatprep.mubr.f32.mxu0 0.0
    %391 = vmatmul.mubr.f32.gmra.mrb[0].mxu0 %v266
    %v392 = vpop.f32.mrb[0].mxu0
    %v393 = vadd.f32 0.0, %v392
    %v394 = vpop.f32.mrb[0].mxu0
    %395 = vmatprep.mubr.f32.mxu0 0.0
    %396 = vmatmul.mubr.f32.gmra.mrb[0].mxu0 %v267
    %v397 = vpop.f32.mrb[0].mxu0
    %v398 = vadd.f32 0.0, %v397
    %v399 = vpop.f32.mrb[0].mxu0
    %400 = vmatprep.mubr.f32.mxu0 0.0
    %401 = vmatmul.mubr.f32.gmra.mrb[0].mxu0 %v268
    %v402 = vpop.f32.mrb[0].mxu0
    %v403 = vadd.f32 0.0, %v402
    %v404 = vpop.f32.mrb[0].mxu0
    %405 = vmatprep.mubr.f32.mxu0 0.0
    %406 = vmatmul.mubr.f32.gmra.mrb[0].mxu0 %v269
    %v407 = vpop.f32.mrb[0].mxu0
    %v408 = vadd.f32 0.0, %v407
    %v409 = vpop.f32.mrb[0].mxu0
    %410 = vmatprep.mubr.f32.mxu0 0.0
    %411 = vmatmul.mubr.f32.gmra.mrb[0].mxu0 %v270
    %v412 = vpop.f32.mrb[0].mxu0
    %v413 = vadd.f32 0.0, %v412
    %v414 = vpop.f32.mrb[0].mxu0
    %415 = vdwg.mxu0
    %v416 = vmul.f32 %v338, 0.03125
    %v417 = vmul.f32 %v343, 0.03125
    %v418 = vmul.f32 %v348, 0.03125
    %v419 = vmul.f32 %v353, 0.03125
    %v420 = vmul.f32 %v358, 0.03125
    %v421 = vmul.f32 %v363, 0.03125
    %v422 = vmul.f32 %v368, 0.03125
    %v423 = vmul.f32 %v373, 0.03125
    %v424 = vmul.f32 %v378, 0.03125
    %v425 = vmul.f32 %v383, 0.03125
    %v426 = vmul.f32 %v388, 0.03125
    %v427 = vmul.f32 %v393, 0.03125
    %v428 = vmul.f32 %v398, 0.03125
    %v429 = vmul.f32 %v403, 0.03125
    %v430 = vmul.f32 %v408, 0.03125
    %v431 = vmul.f32 %v413, 0.03125
    %v432 = vadd.f32 %v416, 1e-06
    %v433 = vadd.f32 %v417, 1e-06
    %v434 = vadd.f32 %v418, 1e-06
    %v435 = vadd.f32 %v419, 1e-06
    %v436 = vadd.f32 %v420, 1e-06
    %v437 = vadd.f32 %v421, 1e-06
    %v438 = vadd.f32 %v422, 1e-06
    %v439 = vadd.f32 %v423, 1e-06
    %v440 = vadd.f32 %v424, 1e-06
    %v441 = vadd.f32 %v425, 1e-06
    %v442 = vadd.f32 %v426, 1e-06
    %v443 = vadd.f32 %v427, 1e-06
    %v444 = vadd.f32 %v428, 1e-06
    %v445 = vadd.f32 %v429, 1e-06
    %v446 = vadd.f32 %v430, 1e-06
    %v447 = vadd.f32 %v431, 1e-06
    %v448 = vrsqrt.pop %v432
    %v449 = vrsqrt.pop %v433
    %v450 = vrsqrt.pop %v434
    %v451 = vrsqrt.pop %v435
    %v452 = vrsqrt.pop %v436
    %v453 = vrsqrt.pop %v437
    %v454 = vrsqrt.pop %v438
    %v455 = vrsqrt.pop %v439
    %v456 = vrsqrt.pop %v440
    %v457 = vrsqrt.pop %v441
    %v458 = vrsqrt.pop %v442
    %v459 = vrsqrt.pop %v443
    %v460 = vrsqrt.pop %v444
    %v461 = vrsqrt.pop %v445
    %v462 = vrsqrt.pop %v446
    %v463 = vrsqrt.pop %v447
    %v464 = vmul.f32 %v239, %v448
    %v465 = vmul.f32 %v240, %v449
    %v466 = vmul.f32 %v241, %v450
    %v467 = vmul.f32 %v242, %v451
    %v468 = vmul.f32 %v243, %v452
    %v469 = vmul.f32 %v244, %v453
    %v470 = vmul.f32 %v245, %v454
    %v471 = vmul.f32 %v246, %v455
    %v472 = vmul.f32 %v247, %v456
    %v473 = vmul.f32 %v248, %v457
    %v474 = vmul.f32 %v249, %v458
    %v475 = vmul.f32 %v250, %v459
    %v476 = vmul.f32 %v251, %v460
    %v477 = vmul.f32 %v252, %v461
    %v478 = vmul.f32 %v253, %v462
    %v479 = vmul.f32 %v254, %v463
    %v480 = vld [vmem:[%s1] sm:$0x1]
    %v482 = vlaneseq
    %v483 = vshrl.u32 %v482, 7
    %v484 = vsub.s32 0, %v483
    %v485 = vrot.slane %v480, %v484
    %v487 = vmul.f32 %v464, %v485
    %v488 = vmul.f32 %v465, %v485
    %v489 = vmul.f32 %v466, %v485
    %v490 = vmul.f32 %v467, %v485
    %v491 = vmul.f32 %v468, %v485
    %v492 = vmul.f32 %v469, %v485
    %v493 = vmul.f32 %v470, %v485
    %v494 = vmul.f32 %v471, %v485
    %v495 = vmul.f32 %v472, %v485
    %v496 = vmul.f32 %v473, %v485
    %v497 = vmul.f32 %v474, %v485
    %v498 = vmul.f32 %v475, %v485
    %v499 = vmul.f32 %v476, %v485
    %v500 = vmul.f32 %v477, %v485
    %v501 = vmul.f32 %v478, %v485
    %v502 = vmul.f32 %v479, %v485
    %v503 = vld [vmem:[%s2] sm:$0x1]
    %v505 = vlaneseq
    %v506 = vshrl.u32 %v505, 7
    %v507 = vsub.s32 0, %v506
    %v508 = vrot.slane %v503, %v507
    %v510 = vadd.f32 %v487, %v508
    %v511 = vadd.f32 %v488, %v508
    %v512 = vadd.f32 %v489, %v508
    %v513 = vadd.f32 %v490, %v508
    %v514 = vadd.f32 %v491, %v508
    %v515 = vadd.f32 %v492, %v508
    %v516 = vadd.f32 %v493, %v508
    %v517 = vadd.f32 %v494, %v508
    %v518 = vadd.f32 %v495, %v508
    %v519 = vadd.f32 %v496, %v508
    %v520 = vadd.f32 %v497, %v508
    %v521 = vadd.f32 %v498, %v508
    %v522 = vadd.f32 %v499, %v508
    %v523 = vadd.f32 %v500, %v508
    %v524 = vadd.f32 %v501, %v508
    %v525 = vadd.f32 %v502, %v508
    %526 = vst [vmem:[#allocation7] sm:$0xff] %v510
    %527 = vst [vmem:[#allocation7 + $0x8] sm:$0xff] %v511
    %528 = vst [vmem:[#allocation7 + $0x10] sm:$0xff] %v512
    %529 = vst [vmem:[#allocation7 + $0x18] sm:$0xff] %v513
    %530 = vst [vmem:[#allocation7 + $0x20] sm:$0xff] %v514
    %531 = vst [vmem:[#allocation7 + $0x28] sm:$0xff] %v515
    %532 = vst [vmem:[#allocation7 + $0x30] sm:$0xff] %v516
    %533 = vst [vmem:[#allocation7 + $0x38] sm:$0xff] %v517
    %534 = vst [vmem:[#allocation7 + $0x40] sm:$0xff] %v518
    %535 = vst [vmem:[#allocation7 + $0x48] sm:$0xff] %v519
    %536 = vst [vmem:[#allocation7 + $0x50] sm:$0xff] %v520
    %537 = vst [vmem:[#allocation7 + $0x58] sm:$0xff] %v521
    %538 = vst [vmem:[#allocation7 + $0x60] sm:$0xff] %v522
    %539 = vst [vmem:[#allocation7 + $0x68] sm:$0xff] %v523
    %540 = vst [vmem:[#allocation7 + $0x70] sm:$0xff] %v524
    %541 = vst [vmem:[#allocation7 + $0x78] sm:$0xff] %v525
    // Predicated region
    $region26: #{tpu_custom_call.1} parent=1 // pred_check
      _
    $region27: #{tpu_custom_call.1} parent=1 // pred_check_branch
      %543 = sbr.rel (0) target = $region29
    $region28: #{tpu_custom_call.1} parent=1 // pred_region
      %s545 = ssub.s32 2048, 2048
      %546 = vsyncadd [#allocation4], %s545
      %s547 = sshll.u32 [#allocation7], 4
      %s548 = int_to_ptr.vmem [resolvable:$true] %s547
      %553 = dma.vmem_to_hbm [thread:$0]  %s548, 2048, %s4, [#allocation4], 128, 128, 8
    $region29: #{tpu_custom_call.1} parent=1 // pred_fallthru
      _
    // Predicated region
    $region30: #{tpu_custom_call.1} parent=1 // pred_check
      _
    $region31: #{tpu_custom_call.1} parent=1 // pred_check_branch
      %555 = sbr.rel (0) target = $region33
    $region32: #{tpu_custom_call.1} parent=1 // pred_region
      %556 = dma.done [#allocation4], 2048
    $region33: #{tpu_custom_call.1} parent=1 // pred_fallthru
      _
    %557 = vsyncpa [#allocation3], 1
    %558 = vsyncpa [#allocation6], 1
    %559 = vsyncpa [#allocation4], 1

</llo_original>
